<compile_context>
chip_gen: v7x
topology: tpu7x:2x2x1
jax: 0.10.0
libtpu: 0.0.40
codegen_flags: <defaults>
</compile_context>

<pallas_src>
from functools import lru_cache

import numpy as np
import jax
import jax.numpy as jnp
from jax import lax
from jax.experimental import pallas as pl
from jax.experimental.pallas import tpu as pltpu

EPS = 1e-8
_OUT_LANES = 128   # lane-dense width of the kernel's partial-sum output
_MAX_UNROLL = 8    # chunk loops at most this long are fully unrolled (static slices)


@lru_cache(maxsize=None)
def _sphere_weight_np(H, W):
    """Equirectangular sphere weights, same formula as the PyTorch loop."""
    theta = np.linspace(0.0, np.pi, num=H + 1)
    dtheta = np.pi / H
    dphi = 2.0 * np.pi / W
    row_w = dphi * (np.sin(theta[:-1]) + np.sin(theta[1:])) / 2.0 * dtheta
    return np.repeat(row_w[:, None].astype(np.float32), W, axis=1)  # (H, W)


@lru_cache(maxsize=None)
def _tpu_generation():
    """Best-effort (physical VMEM bytes per TensorCore, TensorCores per chip)."""
    kind = ""
    try:
        kind = (jax.devices()[0].device_kind or "").lower()
    except Exception:
        pass
    is_v7 = "7" in kind  # e.g. "tpu7x"
    vmem = None
    try:
        vmem = int(pltpu.get_tpu_info().vmem_capacity_bytes)
    except Exception:
        vmem = None
    if vmem is None:
        vmem = (64 << 20) if is_v7 else (128 << 20)
    n_tc = 2 if (is_v7 or vmem <= (64 << 20)) else 1
    return vmem, n_tc


def _choose_row_tile(R, Lp, itemsize):
    """Pick the row tile TM and the scoped-VMEM limit, per TPU generation."""
    align = 8 * max(1, 4 // max(1, itemsize))          # 8 for f32, 16 for bf16
    vmem_phys, n_tc = _tpu_generation()
    # Scoped VMEM budget: 48 MiB on 64 MiB parts (v7x), 96 MiB on 128 MiB parts.
    cap = (48 << 20) if vmem_phys <= (64 << 20) else (96 << 20)
    fixed = 2 * 8 * Lp * 4        # (1, Lp) f32 weight, sublane-padded, 2 buffers
    fixed += 4 << 20              # output blocks, loop spills, Mosaic scratch
    per_row = 2 * 2 * Lp * itemsize  # two inputs, double-buffered by the pipeline
    tm = max(align, ((cap - fixed) // per_row) // align * align)
    tm = min(tm, 64)              # vreg-pressure cap for the in-kernel chunk loops
    r_aligned = -(-R // align) * align
    tm = min(tm, r_aligned)
    # Only 2-TC chips (v7x) need >= 2 grid steps so both cores get work; on
    # single-TC v5e/v6e this would only add per-step overhead.
    if n_tc >= 2 and r_aligned >= 2 * align and tm > r_aligned // 2:
        tm = max(align, (r_aligned // 2) // align * align)
    return tm, cap


def _make_kernel(L, chunk, tm):
    """Two-pass, chunked KL kernel for true row length L (chunk | 128)."""
    n_full = L // chunk           # chunks without padded lanes
    has_tail = (L % chunk) != 0   # last (padded) chunk needs lane masking

    def fold(x, op):
        # (tm, chunk) -> (tm, 128) lane-dense partial.
        if chunk == _OUT_LANES:
            return x
        return op(x[:, :_OUT_LANES], x[:, _OUT_LANES:])

    def kernel(w_ref, p_ref, g_ref, out_ref):
        def chunk_slice(c):
            col = c * chunk
            if not isinstance(col, int):              # dynamic (fori_loop) index
                col = pl.multiple_of(col, chunk)      # 128-aligned, vreg granular
            return pl.ds(col, chunk)

        def tail_mask():
            lane = lax.broadcasted_iota(jnp.int32, (1, chunk), 1)
            return (n_full * chunk + lane) < L

        # ---------------- pass 1: per-row min / max / sum --------------------
        def stats_step(c, carry, valid=None):
            pmin, pmax, psum, gmin, gmax, gsum = carry
            sl = chunk_slice(c)
            pc = p_ref[:, sl].astype(jnp.float32)
            gc = g_ref[:, sl].astype(jnp.float32)
            if valid is None:
                pc_mn = pc_mx = pc_sm = pc
                gc_mn = gc_mx = gc_sm = gc
            else:
                pc_mn = jnp.where(valid, pc, jnp.inf)
                pc_mx = jnp.where(valid, pc, -jnp.inf)
                pc_sm = jnp.where(valid, pc, 0.0)
                gc_mn = jnp.where(valid, gc, jnp.inf)
                gc_mx = jnp.where(valid, gc, -jnp.inf)
                gc_sm = jnp.where(valid, gc, 0.0)
            return (jnp.minimum(pmin, fold(pc_mn, jnp.minimum)),
                    jnp.maximum(pmax, fold(pc_mx, jnp.maximum)),
                    psum + fold(pc_sm, jnp.add),
                    jnp.minimum(gmin, fold(gc_mn, jnp.minimum)),
                    jnp.maximum(gmax, fold(gc_mx, jnp.maximum)),
                    gsum + fold(gc_sm, jnp.add))

        pos = jnp.full((tm, _OUT_LANES), jnp.inf, jnp.float32)
        neg = jnp.full((tm, _OUT_LANES), -jnp.inf, jnp.float32)
        zero = jnp.zeros((tm, _OUT_LANES), jnp.float32)
        carry = (pos, neg, zero, pos, neg, zero)
        if n_full <= _MAX_UNROLL:
            for c in range(n_full):                   # static slices
                carry = stats_step(c, carry)
        else:
            carry = lax.fori_loop(0, n_full, stats_step, carry)
        if has_tail:
            carry = stats_step(n_full, carry, valid=tail_mask())
        pmin_r, pmax_r, psum_r, gmin_r, gmax_r, gsum_r = carry

        pmin = jnp.min(pmin_r, axis=1, keepdims=True)
        pmax = jnp.max(pmax_r, axis=1, keepdims=True)
        psum = jnp.sum(psum_r, axis=1, keepdims=True)
        gmin = jnp.min(gmin_r, axis=1, keepdims=True)
        gmax = jnp.max(gmax_r, axis=1, keepdims=True)
        gsum = jnp.sum(gsum_r, axis=1, keepdims=True)

        # Fused min-max + sum normalisation (exact algebra, not approximate):
        #   p2 = ((p - pmin)/(pmax - pmin + EPS)) / (sum(p1) + EPS)
        #      = (p - pmin) * kp,  kp = 1/(psum - L*pmin + EPS*(pmax - pmin + EPS))
        Lf = jnp.float32(L)
        kp = 1.0 / (psum - Lf * pmin + EPS * (pmax - pmin + EPS))
        kg = 1.0 / (gsum - Lf * gmin + EPS * (gmax - gmin + EPS))

        # ---------------- pass 2: fused KL term + accumulation ---------------
        def kl_step(c, acc, valid=None):
            sl = chunk_slice(c)
            pc = p_ref[:, sl].astype(jnp.float32)
            gc = g_ref[:, sl].astype(jnp.float32)
            wc = w_ref[:, sl]
            pf = (pc - pmin) * kp
            gf = (gc - gmin) * kg
            # Approx EUP reciprocal keeps the per-element divide to one push.
            ratio = gf * pl.reciprocal(pf + EPS, approx=True)
            term = (wc * gf) * jnp.log(ratio + EPS)
            if valid is not None:
                term = jnp.where(valid, term, 0.0)
            return acc + term

        acc = jnp.zeros((tm, chunk), jnp.float32)
        if n_full <= _MAX_UNROLL:
            for c in range(n_full):
                acc = kl_step(c, acc)
        else:
            acc = lax.fori_loop(0, n_full, kl_step, acc)
        if has_tail:
            acc = kl_step(n_full, acc, valid=tail_mask())
        out_ref[...] = fold(acc, jnp.add)

    return kernel


@jax.jit
def kl_weighted_loss_sequence(map_pred, map_gtd):
    bs, nf, H, W = map_pred.shape
    R, L = bs * nf, H * W

    # Column chunk width of the in-kernel passes (always a multiple of 128).
    chunk = 256 if L % 256 == 0 else 128
    Lp = -(-L // chunk) * chunk

    # Native dtype through the HBM->VMEM DMA; chunks are cast to f32 in-kernel.
    p = map_pred.reshape(R, L)
    g = map_gtd.reshape(R, L)
    w = jnp.asarray(_sphere_weight_np(H, W)).reshape(1, L)
    if Lp != L:
        # Only when H*W is not a lane multiple; padded lanes are masked in-kernel.
        p = jnp.pad(p, ((0, 0), (0, Lp - L)))
        g = jnp.pad(g, ((0, 0), (0, Lp - L)))
        w = jnp.pad(w, ((0, 0), (0, Lp - L)))

    itemsize = jnp.dtype(map_pred.dtype).itemsize
    tm, vmem_limit = _choose_row_tile(R, Lp, itemsize)

    out = pl.pallas_call(
        _make_kernel(L, chunk, tm),
        out_shape=jax.ShapeDtypeStruct((R, _OUT_LANES), jnp.float32),
        grid_spec=pltpu.PrefetchScalarGridSpec(
            num_scalar_prefetch=0,
            grid=(pl.cdiv(R, tm),),  # ragged last tile: overhang rows never written
            in_specs=[
                pl.BlockSpec((1, Lp), lambda i: (0, 0)),    # sphere weights (shared)
                pl.BlockSpec((tm, Lp), lambda i: (i, 0)),   # pred rows
                pl.BlockSpec((tm, Lp), lambda i: (i, 0)),   # gt rows
            ],
            out_specs=pl.BlockSpec((tm, _OUT_LANES), lambda i: (i, 0)),
        ),
        compiler_params=pltpu.CompilerParams(
            dimension_semantics=("parallel",),
            vmem_limit_bytes=int(vmem_limit),
        ),
    )(w, p, g)

    # Trivial final 128-lane reduction left to XLA.
    return jnp.sum(out, axis=1).reshape(bs, nf)


def _reference(map_pred, map_gtd):
    # Pure-JAX reference mirroring the PyTorch forward.
    bs, nf, H, W = map_pred.shape
    p = map_pred.astype(jnp.float32).reshape(bs, nf, -1)
    g = map_gtd.astype(jnp.float32).reshape(bs, nf, -1)
    p = (p - p.min(2, keepdims=True)) / (p.max(2, keepdims=True) - p.min(2, keepdims=True) + EPS)
    g = (g - g.min(2, keepdims=True)) / (g.max(2, keepdims=True) - g.min(2, keepdims=True) + EPS)
    p = p / (p.sum(2, keepdims=True) + EPS)
    g = g / (g.sum(2, keepdims=True) + EPS)
    w = jnp.asarray(_sphere_weight_np(H, W)).reshape(1, 1, -1)
    kl = jnp.log(g / (p + EPS) + EPS)
    return jnp.sum(w * g * kl, axis=2)


if __name__ == "__main__":
    key = jax.random.PRNGKey(0)
    k1, k2, k3, k4, k5, k6 = jax.random.split(key, 6)

    # 1) lane-dense path: H*W multiple of 256 (CHUNK=256, no tail mask)
    bs, nf, H, W = 2, 4, 16, 16
    mp = jax.random.uniform(k1, (bs, nf, H, W), dtype=jnp.float32)
    mg = jax.random.uniform(k2, (bs, nf, H, W), dtype=jnp.float32)
    out = kl_weighted_loss_sequence(mp, mg)
    jax.block_until_ready(out)
    ref = _reference(mp, mg)
    assert out.shape == (bs, nf)
    assert jnp.allclose(out, ref, rtol=5e-3, atol=1e-5), (out, ref)

    # 2) tail-mask path: H*W = 240 (not a multiple of 128)
    bs2, nf2, H2, W2 = 1, 3, 12, 20
    mp2 = jax.random.uniform(k3, (bs2, nf2, H2, W2), dtype=jnp.float32)
    mg2 = jax.random.uniform(k4, (bs2, nf2, H2, W2), dtype=jnp.float32)
    out2 = kl_weighted_loss_sequence(mp2, mg2)
    jax.block_until_ready(out2)
    ref2 = _reference(mp2, mg2)
    assert out2.shape == (bs2, nf2)
    assert jnp.allclose(out2, ref2, rtol=5e-3, atol=1e-5), (out2, ref2)

    # 3) multi-step grid with a ragged last row tile (R = 80 not a tile multiple)
    bs3, nf3, H3, W3 = 5, 16, 16, 16
    mp3 = jax.random.uniform(k5, (bs3, nf3, H3, W3), dtype=jnp.float32)
    mg3 = jax.random.uniform(k6, (bs3, nf3, H3, W3), dtype=jnp.float32)
    out3 = kl_weighted_loss_sequence(mp3, mg3)
    jax.block_until_ready(out3)
    ref3 = _reference(mp3, mg3)
    assert out3.shape == (bs3, nf3)
    assert jnp.allclose(out3, ref3, rtol=5e-3, atol=1e-5), (out3, ref3)

    print("KERNEL_OK")
</pallas_src>

<mosaic_0001>
module attributes {stable_mosaic.version = 11 : i64} {
  func.func @kernel(%arg0: i32, %arg1: memref<1x256xf32, #tpu.memory_space<vmem>>, %arg2: memref<8x256xf32, #tpu.memory_space<vmem>>, %arg3: memref<8x256xf32, #tpu.memory_space<vmem>>, %arg4: memref<8x128xf32, #tpu.memory_space<vmem>>) attributes {dimension_semantics = [#tpu.dimension_semantics<parallel>], iteration_bounds = array<i64: 1>, scalar_prefetch = 0 : i64, scratch_operands = 0 : i64, tpu.core_type = #tpu.core_type<tc>, window_params = [{pipeline_mode = #tpu.pipeline_mode<synchronous>, transform_indices = @transform_0, window_bounds = array<i64: 1, 256>}, {transform_indices = @transform_1, window_bounds = array<i64: 8, 256>}, {transform_indices = @transform_2, window_bounds = array<i64: 8, 256>}, {transform_indices = @transform_3, window_bounds = array<i64: 8, 128>}]} {
    %cst = arith.constant 0x7F800000 : f32
    %0 = vector.broadcast %cst : f32 to vector<8x128xf32>
    %cst_0 = arith.constant 0xFF800000 : f32
    %1 = vector.broadcast %cst_0 : f32 to vector<8x128xf32>
    %cst_1 = arith.constant 0.000000e+00 : f32
    %2 = vector.broadcast %cst_1 : f32 to vector<8x128xf32>
    %c0 = arith.constant 0 : index
    %c0_2 = arith.constant 0 : index
    %3 = vector.load %arg2[%c0, %c0_2] : memref<8x256xf32, #tpu.memory_space<vmem>>, vector<8x256xf32>
    %c0_3 = arith.constant 0 : index
    %c0_4 = arith.constant 0 : index
    %4 = vector.load %arg3[%c0_3, %c0_4] : memref<8x256xf32, #tpu.memory_space<vmem>>, vector<8x256xf32>
    %5 = vector.extract_strided_slice %3 {offsets = [0, 0], sizes = [8, 128], strides = [1, 1]} : vector<8x256xf32> to vector<8x128xf32>
    %6 = vector.extract_strided_slice %3 {offsets = [0, 128], sizes = [8, 128], strides = [1, 1]} : vector<8x256xf32> to vector<8x128xf32>
    %7 = arith.minimumf %5, %6 : vector<8x128xf32>
    %8 = arith.minimumf %0, %7 : vector<8x128xf32>
    %9 = vector.extract_strided_slice %3 {offsets = [0, 0], sizes = [8, 128], strides = [1, 1]} : vector<8x256xf32> to vector<8x128xf32>
    %10 = vector.extract_strided_slice %3 {offsets = [0, 128], sizes = [8, 128], strides = [1, 1]} : vector<8x256xf32> to vector<8x128xf32>
    %11 = arith.maximumf %9, %10 : vector<8x128xf32>
    %12 = arith.maximumf %1, %11 : vector<8x128xf32>
    %13 = vector.extract_strided_slice %3 {offsets = [0, 0], sizes = [8, 128], strides = [1, 1]} : vector<8x256xf32> to vector<8x128xf32>
    %14 = vector.extract_strided_slice %3 {offsets = [0, 128], sizes = [8, 128], strides = [1, 1]} : vector<8x256xf32> to vector<8x128xf32>
    %15 = arith.addf %13, %14 : vector<8x128xf32>
    %16 = arith.addf %2, %15 : vector<8x128xf32>
    %17 = vector.extract_strided_slice %4 {offsets = [0, 0], sizes = [8, 128], strides = [1, 1]} : vector<8x256xf32> to vector<8x128xf32>
    %18 = vector.extract_strided_slice %4 {offsets = [0, 128], sizes = [8, 128], strides = [1, 1]} : vector<8x256xf32> to vector<8x128xf32>
    %19 = arith.minimumf %17, %18 : vector<8x128xf32>
    %20 = arith.minimumf %0, %19 : vector<8x128xf32>
    %21 = vector.extract_strided_slice %4 {offsets = [0, 0], sizes = [8, 128], strides = [1, 1]} : vector<8x256xf32> to vector<8x128xf32>
    %22 = vector.extract_strided_slice %4 {offsets = [0, 128], sizes = [8, 128], strides = [1, 1]} : vector<8x256xf32> to vector<8x128xf32>
    %23 = arith.maximumf %21, %22 : vector<8x128xf32>
    %24 = arith.maximumf %1, %23 : vector<8x128xf32>
    %25 = vector.extract_strided_slice %4 {offsets = [0, 0], sizes = [8, 128], strides = [1, 1]} : vector<8x256xf32> to vector<8x128xf32>
    %26 = vector.extract_strided_slice %4 {offsets = [0, 128], sizes = [8, 128], strides = [1, 1]} : vector<8x256xf32> to vector<8x128xf32>
    %27 = arith.addf %25, %26 : vector<8x128xf32>
    %28 = arith.addf %2, %27 : vector<8x128xf32>
    %cst_5 = arith.constant dense<0x7F800000> : vector<8xf32>
    %29 = vector.multi_reduction <minimumf>, %8, %cst_5 [1] : vector<8x128xf32> to vector<8xf32>
    %30 = vector.shape_cast %29 : vector<8xf32> to vector<8x1xf32>
    %cst_6 = arith.constant dense<0xFF800000> : vector<8xf32>
    %31 = vector.multi_reduction <maximumf>, %12, %cst_6 [1] : vector<8x128xf32> to vector<8xf32>
    %32 = vector.shape_cast %31 : vector<8xf32> to vector<8x1xf32>
    %cst_7 = arith.constant dense<0.000000e+00> : vector<8xf32>
    %33 = vector.multi_reduction <add>, %16, %cst_7 [1] : vector<8x128xf32> to vector<8xf32>
    %34 = vector.shape_cast %33 : vector<8xf32> to vector<8x1xf32>
    %cst_8 = arith.constant dense<0x7F800000> : vector<8xf32>
    %35 = vector.multi_reduction <minimumf>, %20, %cst_8 [1] : vector<8x128xf32> to vector<8xf32>
    %36 = vector.shape_cast %35 : vector<8xf32> to vector<8x1xf32>
    %cst_9 = arith.constant dense<0xFF800000> : vector<8xf32>
    %37 = vector.multi_reduction <maximumf>, %24, %cst_9 [1] : vector<8x128xf32> to vector<8xf32>
    %38 = vector.shape_cast %37 : vector<8xf32> to vector<8x1xf32>
    %cst_10 = arith.constant dense<0.000000e+00> : vector<8xf32>
    %39 = vector.multi_reduction <add>, %28, %cst_10 [1] : vector<8x128xf32> to vector<8xf32>
    %40 = vector.shape_cast %39 : vector<8xf32> to vector<8x1xf32>
    %cst_11 = arith.constant 2.560000e+02 : f32
    %41 = vector.broadcast %cst_11 : f32 to vector<8x1xf32>
    %42 = arith.mulf %41, %30 : vector<8x1xf32>
    %43 = arith.subf %34, %42 : vector<8x1xf32>
    %44 = arith.subf %32, %30 : vector<8x1xf32>
    %cst_12 = arith.constant 9.99999993E-9 : f32
    %45 = vector.broadcast %cst_12 : f32 to vector<8x1xf32>
    %46 = arith.addf %44, %45 : vector<8x1xf32>
    %cst_13 = arith.constant 9.99999993E-9 : f32
    %47 = vector.broadcast %cst_13 : f32 to vector<8x1xf32>
    %48 = arith.mulf %47, %46 : vector<8x1xf32>
    %49 = arith.addf %43, %48 : vector<8x1xf32>
    %cst_14 = arith.constant 1.000000e+00 : f32
    %50 = vector.broadcast %cst_14 : f32 to vector<8x1xf32>
    %51 = arith.divf %50, %49 : vector<8x1xf32>
    %cst_15 = arith.constant 2.560000e+02 : f32
    %52 = vector.broadcast %cst_15 : f32 to vector<8x1xf32>
    %53 = arith.mulf %52, %36 : vector<8x1xf32>
    %54 = arith.subf %40, %53 : vector<8x1xf32>
    %55 = arith.subf %38, %36 : vector<8x1xf32>
    %cst_16 = arith.constant 9.99999993E-9 : f32
    %56 = vector.broadcast %cst_16 : f32 to vector<8x1xf32>
    %57 = arith.addf %55, %56 : vector<8x1xf32>
    %cst_17 = arith.constant 9.99999993E-9 : f32
    %58 = vector.broadcast %cst_17 : f32 to vector<8x1xf32>
    %59 = arith.mulf %58, %57 : vector<8x1xf32>
    %60 = arith.addf %54, %59 : vector<8x1xf32>
    %cst_18 = arith.constant 1.000000e+00 : f32
    %61 = vector.broadcast %cst_18 : f32 to vector<8x1xf32>
    %62 = arith.divf %61, %60 : vector<8x1xf32>
    %cst_19 = arith.constant 0.000000e+00 : f32
    %63 = vector.broadcast %cst_19 : f32 to vector<8x256xf32>
    %c0_20 = arith.constant 0 : index
    %c0_21 = arith.constant 0 : index
    %64 = vector.load %arg2[%c0_20, %c0_21] : memref<8x256xf32, #tpu.memory_space<vmem>>, vector<8x256xf32>
    %c0_22 = arith.constant 0 : index
    %c0_23 = arith.constant 0 : index
    %65 = vector.load %arg3[%c0_22, %c0_23] : memref<8x256xf32, #tpu.memory_space<vmem>>, vector<8x256xf32>
    %c0_24 = arith.constant 0 : index
    %c0_25 = arith.constant 0 : index
    %66 = vector.load %arg1[%c0_24, %c0_25] : memref<1x256xf32, #tpu.memory_space<vmem>>, vector<1x256xf32>
    %67 = vector.broadcast %30 : vector<8x1xf32> to vector<8x256xf32>
    %68 = arith.subf %64, %67 : vector<8x256xf32>
    %69 = vector.broadcast %51 : vector<8x1xf32> to vector<8x256xf32>
    %70 = arith.mulf %68, %69 : vector<8x256xf32>
    %71 = vector.broadcast %36 : vector<8x1xf32> to vector<8x256xf32>
    %72 = arith.subf %65, %71 : vector<8x256xf32>
    %73 = vector.broadcast %62 : vector<8x1xf32> to vector<8x256xf32>
    %74 = arith.mulf %72, %73 : vector<8x256xf32>
    %cst_26 = arith.constant 9.99999993E-9 : f32
    %75 = vector.broadcast %cst_26 : f32 to vector<8x256xf32>
    %76 = arith.addf %70, %75 : vector<8x256xf32>
    %77 = tpu.reciprocal %76 {approx = true} : vector<8x256xf32> -> vector<8x256xf32>
    %78 = arith.mulf %74, %77 : vector<8x256xf32>
    %79 = vector.broadcast %66 : vector<1x256xf32> to vector<8x256xf32>
    %80 = arith.mulf %79, %74 : vector<8x256xf32>
    %cst_27 = arith.constant 9.99999993E-9 : f32
    %81 = vector.broadcast %cst_27 : f32 to vector<8x256xf32>
    %82 = arith.addf %78, %81 : vector<8x256xf32>
    %83 = math.log %82 : vector<8x256xf32>
    %84 = arith.mulf %80, %83 : vector<8x256xf32>
    %85 = arith.addf %63, %84 : vector<8x256xf32>
    %86 = vector.extract_strided_slice %85 {offsets = [0, 0], sizes = [8, 128], strides = [1, 1]} : vector<8x256xf32> to vector<8x128xf32>
    %87 = vector.extract_strided_slice %85 {offsets = [0, 128], sizes = [8, 128], strides = [1, 1]} : vector<8x256xf32> to vector<8x128xf32>
    %88 = arith.addf %86, %87 : vector<8x128xf32>
    %c0_28 = arith.constant 0 : index
    %c0_29 = arith.constant 0 : index
    %89 = vector.load %arg4[%c0_28, %c0_29] : memref<8x128xf32, #tpu.memory_space<vmem>>, vector<8x128xf32>
    tpu.vector_store %arg4[%c0_28, %c0_29], %88 {strides = array<i32>} : memref<8x128xf32, #tpu.memory_space<vmem>>, vector<8x128xf32>,
    return
  }
  func.func @transform_0(%arg0: i32) -> (i32, i32) {
    %c0_i32 = arith.constant 0 : i32
    %c0_i32_0 = arith.constant 0 : i32
    %c0_i32_1 = arith.constant 0 : i32
    return %c0_i32, %c0_i32_0 : i32, i32
  }
  func.func @transform_1(%arg0: i32) -> (i32, i32) {
    %c0_i32 = arith.constant 0 : i32
    %c0_i32_0 = arith.constant 0 : i32
    return %arg0, %c0_i32 : i32, i32
  }
  func.func @transform_2(%arg0: i32) -> (i32, i32) {
    %c0_i32 = arith.constant 0 : i32
    %c0_i32_0 = arith.constant 0 : i32
    return %arg0, %c0_i32 : i32, i32
  }
  func.func @transform_3(%arg0: i32) -> (i32, i32) {
    %c0_i32 = arith.constant 0 : i32
    %c0_i32_0 = arith.constant 0 : i32
    return %arg0, %c0_i32 : i32, i32
  }
}

</mosaic_0001>

<llo_original>
// kernel: kl_weighted_loss_sequence.1
$region0: #{kl_weighted_loss_sequence.1}
  #allocation0 [shape = 'u32[]', space=smem, size = 0x4, offset = 0x4, fixed_abs, tag = 'smem constant byte address 0x4 - core index']
  #allocation1 [shape = 'u32[144,128]{1,0:T(1,128)}', space=vmem, size = 0x12000, scoped, tag = 'internal scratch']
  %s0 = inlined_call_operand.hbm [shape: f32[1,256], index: 0, kind: input, shape index: {}]
  %s1 = inlined_call_operand.hbm [shape: f32[8,256], index: 1, kind: input, shape index: {}]
  %s2 = inlined_call_operand.hbm [shape: f32[8,256], index: 2, kind: input, shape index: {}]
  %s3 = inlined_call_operand.hbm [shape: f32[8,128], index: 3, kind: output, shape index: {}]
  %s4 = sld [smem:[#allocation0]]
  $region34: #{kl_weighted_loss_sequence.1} parent=0
    _
  %s6 = ssub.s32 1, %s4
  %s7 = scalar_select 0, %s6, %s4
  $region1: #{kl_weighted_loss_sequence.1} parent=0
    #allocation2 [shape = 'u8[1024]{0}', space=vmem, size = 0x400, scoped, tag = 'input window, operand 0, single buffered']
    #allocation3 [shape = 's32[1]{0}', space=sflag, size = 0x4, scoped, tag = 'scoped memory for kl_weighted_loss_sequence.1']
    #allocation4 [shape = 's32[1]{0}', space=sflag, size = 0x4, scoped, tag = 'scoped memory for kl_weighted_loss_sequence.1']
    #allocation5 [shape = 'u8[8192]{0}', space=vmem, size = 0x2000, scoped, tag = 'input window, operand 1, single buffered']
    #allocation6 [shape = 's32[1]{0}', space=sflag, size = 0x4, scoped, tag = 'scoped memory for kl_weighted_loss_sequence.1']
    #allocation7 [shape = 'u8[8192]{0}', space=vmem, size = 0x2000, scoped, tag = 'input window, operand 2, single buffered']
    #allocation8 [shape = 'u8[4096]{0}', space=vmem, size = 0x1000, scoped, tag = 'output window, operand 0, single buffered']
    %8 = vsyncpa [#allocation3], 0
    %9 = vsyncpa [#allocation6], 0
    %10 = vsyncpa [#allocation4], 0
    // Predicated region
    $region2: #{kl_weighted_loss_sequence.1} parent=1 // pred_check
      _
    $region3: #{kl_weighted_loss_sequence.1} parent=1 // pred_check_branch
      %12 = sbr.rel (0) target = $region5
    $region4: #{kl_weighted_loss_sequence.1} parent=1 // pred_region
      %s14 = ssub.s32 32, 32
      %15 = vsyncadd [#allocation3], %s14
      %s17 = sshll.u32 [#allocation2], 4
      %s18 = int_to_ptr.vmem [resolvable:$true] %s17
      %20 = dma.hbm_to_vmem [thread:$0]  %s0, 32, %s18, [#allocation3]
    $region5: #{kl_weighted_loss_sequence.1} parent=1 // pred_fallthru
      _
    // Predicated region
    $region6: #{kl_weighted_loss_sequence.1} parent=1 // pred_check
      _
    $region7: #{kl_weighted_loss_sequence.1} parent=1 // pred_check_branch
      %22 = sbr.rel (0) target = $region9
    $region8: #{kl_weighted_loss_sequence.1} parent=1 // pred_region
      %s24 = ssub.s32 256, 256
      %25 = vsyncadd [#allocation6], %s24
      %s27 = sshll.u32 [#allocation5], 4
      %s28 = int_to_ptr.vmem [resolvable:$true] %s27
      %30 = dma.hbm_to_vmem [thread:$0]  %s1, 256, %s28, [#allocation6]
    $region9: #{kl_weighted_loss_sequence.1} parent=1 // pred_fallthru
      _
    // Predicated region
    $region10: #{kl_weighted_loss_sequence.1} parent=1 // pred_check
      _
    $region11: #{kl_weighted_loss_sequence.1} parent=1 // pred_check_branch
      %32 = sbr.rel (0) target = $region13
    $region12: #{kl_weighted_loss_sequence.1} parent=1 // pred_region
      %s34 = ssub.s32 256, 256
      %35 = vsyncadd [#allocation6], %s34
      %s37 = sshll.u32 [#allocation7], 4
      %s38 = int_to_ptr.vmem [resolvable:$true] %s37
      %40 = dma.hbm_to_vmem [thread:$0]  %s2, 256, %s38, [#allocation6]
    $region13: #{kl_weighted_loss_sequence.1} parent=1 // pred_fallthru
      _
    // Predicated region
    $region14: #{kl_weighted_loss_sequence.1} parent=1 // pred_check
      _
    $region15: #{kl_weighted_loss_sequence.1} parent=1 // pred_check_branch
      %42 = sbr.rel (0) target = $region17
    $region16: #{kl_weighted_loss_sequence.1} parent=1 // pred_region
      %43 = dma.done [#allocation3], 32
    $region17: #{kl_weighted_loss_sequence.1} parent=1 // pred_fallthru
      _
    // Predicated region
    $region18: #{kl_weighted_loss_sequence.1} parent=1 // pred_check
      _
    $region19: #{kl_weighted_loss_sequence.1} parent=1 // pred_check_branch
      %45 = sbr.rel (0) target = $region21
    $region20: #{kl_weighted_loss_sequence.1} parent=1 // pred_region
      %46 = dma.done [#allocation6], 256
    $region21: #{kl_weighted_loss_sequence.1} parent=1 // pred_fallthru
      _
    // Predicated region
    $region22: #{kl_weighted_loss_sequence.1} parent=1 // pred_check
      _
    $region23: #{kl_weighted_loss_sequence.1} parent=1 // pred_check_branch
      %48 = sbr.rel (0) target = $region25
    $region24: #{kl_weighted_loss_sequence.1} parent=1 // pred_region
      %49 = dma.done [#allocation6], 256
    $region25: #{kl_weighted_loss_sequence.1} parent=1 // pred_fallthru
      _
    %v50 = vld [vmem:[#allocation5] sm:$0xff]
    %v51 = vld [vmem:[#allocation5 + $0x8] sm:$0xff]
    %v52 = vld [vmem:[#allocation7] sm:$0xff]
    %v53 = vld [vmem:[#allocation7 + $0x8] sm:$0xff]
    %v54 = vmin.f32 %v50, %v51
    %v55 = vmax.f32 %v50, %v51
    %v56 = vadd.f32 %v50, %v51
    %v57 = vadd.f32 %v56, 0.0
    %v58 = vmin.f32 %v52, %v53
    %v59 = vmax.f32 %v52, %v53
    %v60 = vadd.f32 %v52, %v53
    %v61 = vadd.f32 %v60, 0.0
    %62 = vmin.xlane.f32.xlu0 %v54
    %v63 = vpop.xlane.xlu0 %62
    %64 = vmax.xlane.f32.xlu0 %v55
    %v65 = vpop.xlane.xlu0 %64
    %66 = vadd.xlane.f32.xlu0 %v57
    %v67 = vpop.xlane.xlu0 %66
    %68 = vmin.xlane.f32.xlu0 %v58
    %v69 = vpop.xlane.xlu0 %68
    %70 = vmax.xlane.f32.xlu0 %v59
    %v71 = vpop.xlane.xlu0 %70
    %72 = vadd.xlane.f32.xlu0 %v61
    %v73 = vpop.xlane.xlu0 %72
    %v74 = vmul.f32 %v63, 256.0
    %v75 = vsub.f32 %v67, %v74
    %v76 = vsub.f32 %v65, %v63
    %v77 = vadd.f32 %v76, 1e-08
    %v78 = vmul.f32 %v77, 1e-08
    %v79 = vadd.f32 %v75, %v78
    %v80 = vrcp.pop %v79
    %v81 = vmul.f32 1.0, %v80
    %v82 = vmul.f32 %v69, 256.0
    %v83 = vsub.f32 %v73, %v82
    %v84 = vsub.f32 %v71, %v69
    %v85 = vadd.f32 %v84, 1e-08
    %v86 = vmul.f32 %v85, 1e-08
    %v87 = vadd.f32 %v83, %v86
    %v88 = vrcp.pop %v87
    %v89 = vmul.f32 1.0, %v88
    %v90 = vld [vmem:[#allocation2] sm:$0x3]
    %v91 = vsub.f32 %v50, %v63
    %v92 = vsub.f32 %v51, %v63
    %v93 = vmul.f32 %v91, %v81
    %v94 = vmul.f32 %v92, %v81
    %v95 = vsub.f32 %v52, %v69
    %v96 = vsub.f32 %v53, %v69
    %v97 = vmul.f32 %v95, %v89
    %v98 = vmul.f32 %v96, %v89
    %v99 = vadd.f32 %v93, 1e-08
    %v100 = vadd.f32 %v94, 1e-08
    %v101 = vrcp.pop %v99
    %v102 = vrcp.pop %v100
    %v103 = vmul.f32 %v97, %v101
    %v104 = vmul.f32 %v98, %v102
    %v106 = vlaneseq
    %v107 = vshrl.u32 %v106, 7
    %v108 = vsub.s32 0, %v107
    %v109 = vrot.slane %v90, %v108
    %v110 = vlaneseq
    %v111 = vshrl.u32 %v110, 7
    %v112 = vsub.s32 1, %v111
    %v113 = vrot.slane %v90, %v112
    %v116 = vmul.f32 %v109, %v97
    %v117 = vmul.f32 %v113, %v98
    %v118 = vadd.f32 %v103, 1e-08
    %v119 = vadd.f32 %v104, 1e-08
    %v120 = vlog2.pop %v118
    %v121 = vmul.f32 %v120, 0.6931472
    %v122 = vlog2.pop %v119
    %v123 = vmul.f32 %v122, 0.6931472
    %v124 = vmul.f32 %v116, %v121
    %v125 = vmul.f32 %v117, %v123
    %v126 = vadd.f32 %v124, 0.0
    %v127 = vadd.f32 %v125, 0.0
    %v128 = vadd.f32 %v126, %v127
    %129 = vst [vmem:[#allocation8] sm:$0xff] %v128
    // Predicated region
    $region26: #{kl_weighted_loss_sequence.1} parent=1 // pred_check
      _
    $region27: #{kl_weighted_loss_sequence.1} parent=1 // pred_check_branch
      %131 = sbr.rel (0) target = $region29
    $region28: #{kl_weighted_loss_sequence.1} parent=1 // pred_region
      %s133 = ssub.s32 128, 128
      %134 = vsyncadd [#allocation4], %s133
      %s136 = sshll.u32 [#allocation8], 4
      %s137 = int_to_ptr.vmem [resolvable:$true] %s136
      %139 = dma.vmem_to_hbm [thread:$0]  %s137, 128, %s3, [#allocation4]
    $region29: #{kl_weighted_loss_sequence.1} parent=1 // pred_fallthru
      _
    // Predicated region
    $region30: #{kl_weighted_loss_sequence.1} parent=1 // pred_check
      _
    $region31: #{kl_weighted_loss_sequence.1} parent=1 // pred_check_branch
      %141 = sbr.rel (0) target = $region33
    $region32: #{kl_weighted_loss_sequence.1} parent=1 // pred_region
      %142 = dma.done [#allocation4], 128
    $region33: #{kl_weighted_loss_sequence.1} parent=1 // pred_fallthru
      _
    %143 = vsyncpa [#allocation3], 1
    %144 = vsyncpa [#allocation6], 1
    %145 = vsyncpa [#allocation4], 1

</llo_original>
